<compile_context>
chip_gen: v6e
topology: v6e:2x2x1
jax: 0.10.0
libtpu: 0.0.40
codegen_flags: <defaults>
</compile_context>

<pallas_src>
import functools

import numpy as np

import jax
import jax.numpy as jnp
from jax import lax
from jax.experimental import pallas as pl
from jax.experimental.pallas import tpu as pltpu


def resblock_kernel(x_ref, w1_ref, b1_ref, w2_ref, b2_ref, o_ref, im2row_ref,
                    *, B, H, W, C, P):
    """One block of B images (M = B*H lane-dense rows) per grid step.

    x_ref:      (M, W*C)      bf16 lane-dense input rows
    w1_ref:     (3*W*C, W*P)  fused dy block-Toeplitz weights, BN1 scale folded
    b1_ref:     (1, W*P)      folded BN1 bias (f32)
    w2_ref:     (3*W*P, W*P)  fused dy block-Toeplitz weights, BN2 scale folded
    b2_ref:     (1, W*P)      folded BN2 bias (f32)
    o_ref:      (M, W*P)      lane-dense output rows
    im2row_ref: (M, 3*W*C)    dy-im2row scratch (bf16)
    """
    WC = W * C

    # Zero the per-image "corner" rows of the im2row scratch (vertical 'same'
    # padding).  They are never touched by the shifted copies below, so one
    # zeroing per grid step covers both convolutions.  Re-zeroed every step
    # for megacore safety (see header note); cost is 2 row-stores per image.
    zrow = jnp.zeros((1, WC), im2row_ref.dtype)
    for b in range(B):
        r0 = b * H
        im2row_ref[r0:r0 + 1, 0:WC] = zrow                      # dy=0, top row
        im2row_ref[r0 + H - 1:r0 + H, 2 * WC:3 * WC] = zrow     # dy=2, bottom

    def fill_im2row(src):
        """src row m -> im2row cols [dy*WC:(dy+1)*WC], shifted by dy-1 rows
        within each image (horizontal 'same' padding is folded into the
        Toeplitz weights; vertical padding = the pre-zeroed corner rows)."""
        im2row_ref[:, WC:2 * WC] = src[...]                     # dy = 1 centre
        for b in range(B):
            r0 = b * H
            # dy = 0: output row y reads input row y-1.
            im2row_ref[r0 + 1:r0 + H, 0:WC] = src[r0:r0 + H - 1, :]
            # dy = 2: output row y reads input row y+1.
            im2row_ref[r0:r0 + H - 1, 2 * WC:3 * WC] = src[r0 + 1:r0 + H, :]

    # ---- conv1 (BN1 scale folded into w1) -> +bias -> ReLU ----
    fill_im2row(x_ref)
    h1 = jnp.dot(im2row_ref[...], w1_ref[...],
                 preferred_element_type=jnp.float32)            # (M, W*P) f32
    h1 = jnp.maximum(h1 + b1_ref[...], 0.0)

    # ---- conv2 (BN2 scale folded into w2) ----
    fill_im2row(h1.astype(im2row_ref.dtype))
    h2 = jnp.dot(im2row_ref[...], w2_ref[...],
                 preferred_element_type=jnp.float32)            # (M, W*P) f32

    # ---- +bias + residual add (re-read x from VMEM) + ReLU ----
    out = jnp.maximum(h2 + b2_ref[...] + x_ref[...].astype(jnp.float32), 0.0)
    o_ref[...] = out.astype(o_ref.dtype)


def _build_fused_toeplitz(w, scale, width, dtype):
    """HWIO (3,3,Cin,Cout) conv weight with per-Cout BN scale folded in ->
    fused block-Toeplitz slab of shape (3*width*Cin, width*Cout).

    Row dy*width*Cin + u*Cin + c, col x*Cout + p holds scale[p]*w[dy,u-x+1,c,p]
    when 0 <= u-x+1 < 3, else 0 (horizontal 'same' padding by dropped taps).
    Built with numpy (host) to avoid O(9*W^2) trace-time scatter updates; call
    outside jit.
    """
    w = np.asarray(w, np.float32) * np.asarray(scale, np.float32)[None, None, None, :]
    kh, kw, cin, cout = w.shape
    slab = np.zeros((kh, width, cin, width, cout), np.float32)
    for dy in range(kh):
        for dx in range(kw):
            for xcol in range(width):
                u = xcol + dx - 1
                if 0 <= u < width:
                    slab[dy, u, :, xcol, :] = w[dy, dx]
    return jnp.asarray(slab.reshape(kh * width * cin, width * cout), dtype)


def _pick_batch_block(n, h, max_rows=256):
    """Largest divisor b of n with b*h <= max_rows, preferring >= 2 grid steps
    so both v7x TensorCores get work."""
    candidates = [b for b in range(1, n + 1) if n % b == 0 and b * h <= max_rows]
    if not candidates:
        return 1
    multi = [b for b in candidates if n // b >= 2]
    return max(multi) if multi else max(candidates)


def resblock_pallas(x, w1, s1, b1, w2, s2, b2, *,
                    compute_dtype=jnp.bfloat16, max_rows=256):
    """x: (N, H, W, C) NHWC; w*: (3, 3, Cin, Cout) HWIO; s*/b*: (Cout,) folded
    eval-mode BN scale / bias (conv bias already folded into b*)."""
    N, H, W, C = x.shape
    P = w1.shape[-1]
    assert P == C, "residual add requires inplanes == planes"
    assert w2.shape == (3, 3, P, P)
    WC, WP = W * C, W * P

    B_blk = _pick_batch_block(N, H, max_rows)
    M = B_blk * H
    assert M % 8 == 0 or N // B_blk == 1, "block row count must be 8-aligned"

    # Lane-dense view + bf16 MXU operands (wrapper-side layout plumbing).
    x2d = x.reshape(N * H, WC).astype(compute_dtype)            # free reshape
    w1f = _build_fused_toeplitz(w1, s1, W, compute_dtype)       # (3*WC, WP)
    w2f = _build_fused_toeplitz(w2, s2, W, compute_dtype)       # (3*WP, WP)
    b1t = jnp.tile(jnp.asarray(b1, jnp.float32).reshape(-1), W).reshape(1, WP)
    b2t = jnp.tile(jnp.asarray(b2, jnp.float32).reshape(-1), W).reshape(1, WP)

    kernel = functools.partial(resblock_kernel, B=B_blk, H=H, W=W, C=C, P=P)

    # VMEM budget from the actual footprint (streams double-buffered).
    isz = jnp.dtype(compute_dtype).itemsize
    osz = jnp.dtype(x.dtype).itemsize
    footprint = (2 * M * WC * isz                    # x block (double-buffered)
                 + 2 * M * WP * osz                  # out block
                 + 2 * (3 * WC * WP + 3 * WP * WP) * isz   # weight slabs
                 + 2 * 2 * WP * 4                    # biases
                 + M * 3 * WC * isz)                 # im2row scratch
    vmem_limit = int(min(100 * 2**20, max(16 * 2**20, 2 * footprint)))

    flops = int(2 * 2 * (N * H) * (3 * WC) * WP)     # 2 convs, 2*M*K*N each
    bytes_accessed = int(x2d.size * isz + N * H * WP * osz
                         + (w1f.size + w2f.size) * isz
                         + (b1t.size + b2t.size) * 4)

    grid_spec = pltpu.PrefetchScalarGridSpec(
        num_scalar_prefetch=0,
        grid=(N // B_blk,),
        in_specs=[
            pl.BlockSpec((M, WC), lambda n: (n, 0)),
            pl.BlockSpec((3 * WC, WP), lambda n: (0, 0)),
            pl.BlockSpec((1, WP), lambda n: (0, 0)),
            pl.BlockSpec((3 * WP, WP), lambda n: (0, 0)),
            pl.BlockSpec((1, WP), lambda n: (0, 0)),
        ],
        out_specs=pl.BlockSpec((M, WP), lambda n: (n, 0)),
        scratch_shapes=[pltpu.VMEM((M, 3 * WC), compute_dtype)],
    )

    out2d = pl.pallas_call(
        kernel,
        out_shape=jax.ShapeDtypeStruct((N * H, WP), x.dtype),
        grid_spec=grid_spec,
        compiler_params=pltpu.CompilerParams(
            dimension_semantics=("parallel",),
            vmem_limit_bytes=vmem_limit),
        cost_estimate=pl.CostEstimate(
            flops=flops, transcendentals=0, bytes_accessed=bytes_accessed),
    )(x2d, w1f, b1t, w2f, b2t)

    return out2d.reshape(N, H, W, P)                 # free reshape back


def resblock_reference(x, w1, cb1, g1, be1, m1, v1, w2, cb2, g2, be2, m2, v2,
                       eps=1e-5):
    """Pure-JAX f32 reference of the PyTorch ResBlock (eval-mode BN), NHWC."""
    dn = ("NHWC", "HWIO", "NHWC")
    y = lax.conv_general_dilated(x, w1, (1, 1), "SAME",
                                 dimension_numbers=dn) + cb1
    y = (y - m1) / jnp.sqrt(v1 + eps) * g1 + be1
    y = jnp.maximum(y, 0.0)
    z = lax.conv_general_dilated(y, w2, (1, 1), "SAME",
                                 dimension_numbers=dn) + cb2
    z = (z - m2) / jnp.sqrt(v2 + eps) * g2 + be2
    return jnp.maximum(z + x, 0.0)


def resblock_reference_bf16(x, w1, s1, b1, w2, s2, b2):
    """Reference with the kernel's exact numerics: bf16 activations and
    scale-folded bf16 weights, f32 accumulation and f32 epilogue."""
    dn = ("NHWC", "HWIO", "NHWC")
    cd = jnp.bfloat16
    xq = x.astype(cd)
    w1q = (w1 * s1).astype(cd)
    w2q = (w2 * s2).astype(cd)
    y = lax.conv_general_dilated(xq, w1q, (1, 1), "SAME", dimension_numbers=dn,
                                 preferred_element_type=jnp.float32)
    h1 = jnp.maximum(y + b1, 0.0).astype(cd)
    z = lax.conv_general_dilated(h1, w2q, (1, 1), "SAME", dimension_numbers=dn,
                                 preferred_element_type=jnp.float32)
    return jnp.maximum(z + b2 + xq.astype(jnp.float32), 0.0)


def _fold_bn(conv_bias, gamma, beta, mean, var, eps=1e-5):
    scale = gamma / jnp.sqrt(var + eps)
    bias = (conv_bias - mean) * scale + beta
    return scale, bias


if __name__ == "__main__":
    # Small shapes: batch=4, channels=8 (inplanes == planes), spatial=16x16.
    # (NHWC here; corresponds to the module's NCHW input (4, 8, 16, 16).)
    N, H, W, C = 4, 16, 16, 8
    P = C
    eps = 1e-5

    key = jax.random.PRNGKey(0)
    keys = jax.random.split(key, 13)

    x = jax.random.normal(keys[0], (N, H, W, C), jnp.float32)

    # Conv weights in HWIO layout (PyTorch OIHW transposed).
    w1 = 0.2 * jax.random.normal(keys[1], (3, 3, C, P), jnp.float32)
    cb1 = 0.1 * jax.random.normal(keys[2], (P,), jnp.float32)
    w2 = 0.2 * jax.random.normal(keys[3], (3, 3, P, P), jnp.float32)
    cb2 = 0.1 * jax.random.normal(keys[4], (P,), jnp.float32)

    # BatchNorm parameters / running stats (eval mode).
    g1 = 0.5 + jax.random.uniform(keys[5], (P,), jnp.float32)
    be1 = 0.1 * jax.random.normal(keys[6], (P,), jnp.float32)
    m1 = 0.1 * jax.random.normal(keys[7], (P,), jnp.float32)
    v1 = 0.5 + jax.random.uniform(keys[8], (P,), jnp.float32)

    g2 = 0.5 + jax.random.uniform(keys[9], (P,), jnp.float32)
    be2 = 0.1 * jax.random.normal(keys[10], (P,), jnp.float32)
    m2 = 0.1 * jax.random.normal(keys[11], (P,), jnp.float32)
    v2 = 0.5 + jax.random.uniform(keys[12], (P,), jnp.float32)

    # Fold conv bias + BN into per-channel scale/bias for the kernel.
    s1, b1 = _fold_bn(cb1, g1, be1, m1, v1, eps)
    s2, b2 = _fold_bn(cb2, g2, be2, m2, v2, eps)

    out = resblock_pallas(x, w1, s1, b1, w2, s2, b2)
    out = jax.block_until_ready(out)
    assert out.shape == (N, H, W, P)

    # Tight check against a reference with identical bf16-MXU / f32-acc math.
    ref_q = jax.block_until_ready(
        resblock_reference_bf16(x, w1, s1, b1, w2, s2, b2))
    err_q = jnp.max(jnp.abs(out - ref_q))
    assert jnp.allclose(out, ref_q, rtol=2e-2, atol=2e-2), (
        f"bf16-matched reference max abs err = {err_q}")

    # Loose check against the full-f32 module semantics (bf16 quantization).
    ref = jax.block_until_ready(
        resblock_reference(x, w1, cb1, g1, be1, m1, v1,
                           w2, cb2, g2, be2, m2, v2, eps))
    err_f = jnp.max(jnp.abs(out - ref))
    assert jnp.allclose(out, ref, rtol=5e-2, atol=2.5e-1), (
        f"f32 reference max abs err = {err_f}")

    print("KERNEL_OK")
</pallas_src>

<mosaic_0001>
module attributes {stable_mosaic.version = 11 : i64} {
  func.func @resblock_kernel(%arg0: i32, %arg1: memref<32x128xbf16, #tpu.memory_space<vmem>>, %arg2: memref<384x128xbf16, #tpu.memory_space<vmem>>, %arg3: memref<1x128xf32, #tpu.memory_space<vmem>>, %arg4: memref<384x128xbf16, #tpu.memory_space<vmem>>, %arg5: memref<1x128xf32, #tpu.memory_space<vmem>>, %arg6: memref<32x128xf32, #tpu.memory_space<vmem>>, %arg7: memref<32x384xbf16, #tpu.memory_space<vmem>>) attributes {dimension_semantics = [#tpu.dimension_semantics<parallel>], iteration_bounds = array<i64: 2>, scalar_prefetch = 0 : i64, scratch_operands = 1 : i64, tpu.core_type = #tpu.core_type<tc>, window_params = [{transform_indices = @transform_0, window_bounds = array<i64: 32, 128>}, {pipeline_mode = #tpu.pipeline_mode<synchronous>, transform_indices = @transform_1, window_bounds = array<i64: 384, 128>}, {pipeline_mode = #tpu.pipeline_mode<synchronous>, transform_indices = @transform_2, window_bounds = array<i64: 1, 128>}, {pipeline_mode = #tpu.pipeline_mode<synchronous>, transform_indices = @transform_3, window_bounds = array<i64: 384, 128>}, {pipeline_mode = #tpu.pipeline_mode<synchronous>, transform_indices = @transform_4, window_bounds = array<i64: 1, 128>}, {transform_indices = @transform_5, window_bounds = array<i64: 32, 128>}]} {
    %cst = arith.constant 0.000000e+00 : bf16
    %0 = vector.broadcast %cst : bf16 to vector<1x128xbf16>
    %c0 = arith.constant 0 : index
    %c0_0 = arith.constant 0 : index
    %1 = vector.load %arg7[%c0, %c0_0] : memref<32x384xbf16, #tpu.memory_space<vmem>>, vector<1x128xbf16>
    tpu.vector_store %arg7[%c0, %c0_0], %0 {strides = array<i32>} : memref<32x384xbf16, #tpu.memory_space<vmem>>, vector<1x128xbf16>,
    %c15 = arith.constant 15 : index
    %c256 = arith.constant 256 : index
    %2 = vector.load %arg7[%c15, %c256] : memref<32x384xbf16, #tpu.memory_space<vmem>>, vector<1x128xbf16>
    tpu.vector_store %arg7[%c15, %c256], %0 {strides = array<i32>} : memref<32x384xbf16, #tpu.memory_space<vmem>>, vector<1x128xbf16>,
    %c16 = arith.constant 16 : index
    %c0_1 = arith.constant 0 : index
    %3 = vector.load %arg7[%c16, %c0_1] : memref<32x384xbf16, #tpu.memory_space<vmem>>, vector<1x128xbf16>
    tpu.vector_store %arg7[%c16, %c0_1], %0 {strides = array<i32>} : memref<32x384xbf16, #tpu.memory_space<vmem>>, vector<1x128xbf16>,
    %c31 = arith.constant 31 : index
    %c256_2 = arith.constant 256 : index
    %4 = vector.load %arg7[%c31, %c256_2] : memref<32x384xbf16, #tpu.memory_space<vmem>>, vector<1x128xbf16>
    tpu.vector_store %arg7[%c31, %c256_2], %0 {strides = array<i32>} : memref<32x384xbf16, #tpu.memory_space<vmem>>, vector<1x128xbf16>,
    %c0_3 = arith.constant 0 : index
    %c0_4 = arith.constant 0 : index
    %5 = vector.load %arg1[%c0_3, %c0_4] : memref<32x128xbf16, #tpu.memory_space<vmem>>, vector<32x128xbf16>
    %c0_5 = arith.constant 0 : index
    %c128 = arith.constant 128 : index
    %6 = vector.load %arg7[%c0_5, %c128] : memref<32x384xbf16, #tpu.memory_space<vmem>>, vector<32x128xbf16>
    tpu.vector_store %arg7[%c0_5, %c128], %5 {strides = array<i32>} : memref<32x384xbf16, #tpu.memory_space<vmem>>, vector<32x128xbf16>,
    %c0_6 = arith.constant 0 : index
    %c0_7 = arith.constant 0 : index
    %7 = vector.load %arg1[%c0_6, %c0_7] : memref<32x128xbf16, #tpu.memory_space<vmem>>, vector<15x128xbf16>
    %c1 = arith.constant 1 : index
    %c0_8 = arith.constant 0 : index
    %8 = vector.load %arg7[%c1, %c0_8] : memref<32x384xbf16, #tpu.memory_space<vmem>>, vector<15x128xbf16>
    tpu.vector_store %arg7[%c1, %c0_8], %7 {strides = array<i32>} : memref<32x384xbf16, #tpu.memory_space<vmem>>, vector<15x128xbf16>,
    %c1_9 = arith.constant 1 : index
    %c0_10 = arith.constant 0 : index
    %9 = vector.load %arg1[%c1_9, %c0_10] : memref<32x128xbf16, #tpu.memory_space<vmem>>, vector<15x128xbf16>
    %c0_11 = arith.constant 0 : index
    %c256_12 = arith.constant 256 : index
    %10 = vector.load %arg7[%c0_11, %c256_12] : memref<32x384xbf16, #tpu.memory_space<vmem>>, vector<15x128xbf16>
    tpu.vector_store %arg7[%c0_11, %c256_12], %9 {strides = array<i32>} : memref<32x384xbf16, #tpu.memory_space<vmem>>, vector<15x128xbf16>,
    %c16_13 = arith.constant 16 : index
    %c0_14 = arith.constant 0 : index
    %11 = vector.load %arg1[%c16_13, %c0_14] : memref<32x128xbf16, #tpu.memory_space<vmem>>, vector<15x128xbf16>
    %c17 = arith.constant 17 : index
    %c0_15 = arith.constant 0 : index
    %12 = vector.load %arg7[%c17, %c0_15] : memref<32x384xbf16, #tpu.memory_space<vmem>>, vector<15x128xbf16>
    tpu.vector_store %arg7[%c17, %c0_15], %11 {strides = array<i32>} : memref<32x384xbf16, #tpu.memory_space<vmem>>, vector<15x128xbf16>,
    %c17_16 = arith.constant 17 : index
    %c0_17 = arith.constant 0 : index
    %13 = vector.load %arg1[%c17_16, %c0_17] : memref<32x128xbf16, #tpu.memory_space<vmem>>, vector<15x128xbf16>
    %c16_18 = arith.constant 16 : index
    %c256_19 = arith.constant 256 : index
    %14 = vector.load %arg7[%c16_18, %c256_19] : memref<32x384xbf16, #tpu.memory_space<vmem>>, vector<15x128xbf16>
    tpu.vector_store %arg7[%c16_18, %c256_19], %13 {strides = array<i32>} : memref<32x384xbf16, #tpu.memory_space<vmem>>, vector<15x128xbf16>,
    %c0_20 = arith.constant 0 : index
    %c0_21 = arith.constant 0 : index
    %15 = vector.load %arg7[%c0_20, %c0_21] : memref<32x384xbf16, #tpu.memory_space<vmem>>, vector<32x384xbf16>
    %c0_22 = arith.constant 0 : index
    %c0_23 = arith.constant 0 : index
    %16 = vector.load %arg2[%c0_22, %c0_23] : memref<384x128xbf16, #tpu.memory_space<vmem>>, vector<384x128xbf16>
    %cst_24 = arith.constant dense<0.000000e+00> : vector<32x128xf32>
    %17 = tpu.matmul %15, %16, %cst_24 {dimension_numbers = #tpu.dot_dimension_numbers<[1], [0], [0], [1], [0, 0, 1, 1], [], []>} : vector<32x384xbf16>, vector<384x128xbf16>, vector<32x128xf32> -> vector<32x128xf32>
    %c0_25 = arith.constant 0 : index
    %c0_26 = arith.constant 0 : index
    %18 = vector.load %arg3[%c0_25, %c0_26] : memref<1x128xf32, #tpu.memory_space<vmem>>, vector<1x128xf32>
    %19 = vector.broadcast %18 : vector<1x128xf32> to vector<32x128xf32>
    %20 = arith.addf %17, %19 : vector<32x128xf32>
    %cst_27 = arith.constant 0.000000e+00 : f32
    %21 = vector.broadcast %cst_27 : f32 to vector<32x128xf32>
    %22 = arith.maximumf %20, %21 : vector<32x128xf32>
    %23 = arith.truncf %22 : vector<32x128xf32> to vector<32x128xbf16>
    %c0_28 = arith.constant 0 : index
    %c128_29 = arith.constant 128 : index
    %24 = vector.load %arg7[%c0_28, %c128_29] : memref<32x384xbf16, #tpu.memory_space<vmem>>, vector<32x128xbf16>
    tpu.vector_store %arg7[%c0_28, %c128_29], %23 {strides = array<i32>} : memref<32x384xbf16, #tpu.memory_space<vmem>>, vector<32x128xbf16>,
    %25 = vector.extract_strided_slice %23 {offsets = [0, 0], sizes = [15, 128], strides = [1, 1]} : vector<32x128xbf16> to vector<15x128xbf16>
    %c1_30 = arith.constant 1 : index
    %c0_31 = arith.constant 0 : index
    %26 = vector.load %arg7[%c1_30, %c0_31] : memref<32x384xbf16, #tpu.memory_space<vmem>>, vector<15x128xbf16>
    tpu.vector_store %arg7[%c1_30, %c0_31], %25 {strides = array<i32>} : memref<32x384xbf16, #tpu.memory_space<vmem>>, vector<15x128xbf16>,
    %27 = vector.extract_strided_slice %23 {offsets = [1, 0], sizes = [15, 128], strides = [1, 1]} : vector<32x128xbf16> to vector<15x128xbf16>
    %c0_32 = arith.constant 0 : index
    %c256_33 = arith.constant 256 : index
    %28 = vector.load %arg7[%c0_32, %c256_33] : memref<32x384xbf16, #tpu.memory_space<vmem>>, vector<15x128xbf16>
    tpu.vector_store %arg7[%c0_32, %c256_33], %27 {strides = array<i32>} : memref<32x384xbf16, #tpu.memory_space<vmem>>, vector<15x128xbf16>,
    %29 = vector.extract_strided_slice %23 {offsets = [16, 0], sizes = [15, 128], strides = [1, 1]} : vector<32x128xbf16> to vector<15x128xbf16>
    %c17_34 = arith.constant 17 : index
    %c0_35 = arith.constant 0 : index
    %30 = vector.load %arg7[%c17_34, %c0_35] : memref<32x384xbf16, #tpu.memory_space<vmem>>, vector<15x128xbf16>
    tpu.vector_store %arg7[%c17_34, %c0_35], %29 {strides = array<i32>} : memref<32x384xbf16, #tpu.memory_space<vmem>>, vector<15x128xbf16>,
    %31 = vector.extract_strided_slice %23 {offsets = [17, 0], sizes = [15, 128], strides = [1, 1]} : vector<32x128xbf16> to vector<15x128xbf16>
    %c16_36 = arith.constant 16 : index
    %c256_37 = arith.constant 256 : index
    %32 = vector.load %arg7[%c16_36, %c256_37] : memref<32x384xbf16, #tpu.memory_space<vmem>>, vector<15x128xbf16>
    tpu.vector_store %arg7[%c16_36, %c256_37], %31 {strides = array<i32>} : memref<32x384xbf16, #tpu.memory_space<vmem>>, vector<15x128xbf16>,
    %c0_38 = arith.constant 0 : index
    %c0_39 = arith.constant 0 : index
    %33 = vector.load %arg7[%c0_38, %c0_39] : memref<32x384xbf16, #tpu.memory_space<vmem>>, vector<32x384xbf16>
    %c0_40 = arith.constant 0 : index
    %c0_41 = arith.constant 0 : index
    %34 = vector.load %arg4[%c0_40, %c0_41] : memref<384x128xbf16, #tpu.memory_space<vmem>>, vector<384x128xbf16>
    %cst_42 = arith.constant dense<0.000000e+00> : vector<32x128xf32>
    %35 = tpu.matmul %33, %34, %cst_42 {dimension_numbers = #tpu.dot_dimension_numbers<[1], [0], [0], [1], [0, 0, 1, 1], [], []>} : vector<32x384xbf16>, vector<384x128xbf16>, vector<32x128xf32> -> vector<32x128xf32>
    %c0_43 = arith.constant 0 : index
    %c0_44 = arith.constant 0 : index
    %36 = vector.load %arg5[%c0_43, %c0_44] : memref<1x128xf32, #tpu.memory_space<vmem>>, vector<1x128xf32>
    %37 = vector.broadcast %36 : vector<1x128xf32> to vector<32x128xf32>
    %38 = arith.addf %35, %37 : vector<32x128xf32>
    %c0_45 = arith.constant 0 : index
    %c0_46 = arith.constant 0 : index
    %39 = vector.load %arg1[%c0_45, %c0_46] : memref<32x128xbf16, #tpu.memory_space<vmem>>, vector<32x128xbf16>
    %40 = arith.extf %39 : vector<32x128xbf16> to vector<32x128xf32>
    %41 = arith.addf %38, %40 : vector<32x128xf32>
    %cst_47 = arith.constant 0.000000e+00 : f32
    %42 = vector.broadcast %cst_47 : f32 to vector<32x128xf32>
    %43 = arith.maximumf %41, %42 : vector<32x128xf32>
    %c0_48 = arith.constant 0 : index
    %c0_49 = arith.constant 0 : index
    %44 = vector.load %arg6[%c0_48, %c0_49] : memref<32x128xf32, #tpu.memory_space<vmem>>, vector<32x128xf32>
    tpu.vector_store %arg6[%c0_48, %c0_49], %43 {strides = array<i32>} : memref<32x128xf32, #tpu.memory_space<vmem>>, vector<32x128xf32>,
    return
  }
  func.func @transform_0(%arg0: i32) -> (i32, i32) {
    %c0_i32 = arith.constant 0 : i32
    %c0_i32_0 = arith.constant 0 : i32
    return %arg0, %c0_i32 : i32, i32
  }
  func.func @transform_1(%arg0: i32) -> (i32, i32) {
    %c0_i32 = arith.constant 0 : i32
    %c0_i32_0 = arith.constant 0 : i32
    %c0_i32_1 = arith.constant 0 : i32
    return %c0_i32, %c0_i32_0 : i32, i32
  }
  func.func @transform_2(%arg0: i32) -> (i32, i32) {
    %c0_i32 = arith.constant 0 : i32
    %c0_i32_0 = arith.constant 0 : i32
    %c0_i32_1 = arith.constant 0 : i32
    return %c0_i32, %c0_i32_0 : i32, i32
  }
  func.func @transform_3(%arg0: i32) -> (i32, i32) {
    %c0_i32 = arith.constant 0 : i32
    %c0_i32_0 = arith.constant 0 : i32
    %c0_i32_1 = arith.constant 0 : i32
    return %c0_i32, %c0_i32_0 : i32, i32
  }
  func.func @transform_4(%arg0: i32) -> (i32, i32) {
    %c0_i32 = arith.constant 0 : i32
    %c0_i32_0 = arith.constant 0 : i32
    %c0_i32_1 = arith.constant 0 : i32
    return %c0_i32, %c0_i32_0 : i32, i32
  }
  func.func @transform_5(%arg0: i32) -> (i32, i32) {
    %c0_i32 = arith.constant 0 : i32
    %c0_i32_0 = arith.constant 0 : i32
    return %arg0, %c0_i32 : i32, i32
  }
}

</mosaic_0001>

<llo_original>
// kernel: tpu_custom_call.1
$region0: #{tpu_custom_call.1}
  #allocation0 [shape = 'u32[]', space=smem, size = 0x4, offset = 0x4, fixed_abs, tag = 'smem constant byte address 0x4 - core index']
  #allocation1 [shape = 'u32[144,128]{1,0:T(1,128)}', space=vmem, size = 0x12000, scoped, tag = 'internal scratch']
  #allocation2 [shape = 'bf16[32,384]{1,0:T(8,128)(2,1)}', space=vmem, size = 0x6000, scoped, tag = 'scratch operand']
  %s0 = inlined_call_operand.hbm [shape: bf16[64,128], index: 0, kind: input, shape index: {}]
  %s1 = inlined_call_operand.hbm [shape: bf16[384,128], index: 1, kind: input, shape index: {}]
  %s2 = inlined_call_operand.vmem [shape: f32[1,128], index: 2, kind: input, shape index: {}]
  %s3 = inlined_call_operand.hbm [shape: bf16[384,128], index: 3, kind: input, shape index: {}]
  %s4 = inlined_call_operand.vmem [shape: f32[1,128], index: 4, kind: input, shape index: {}]
  %s5 = inlined_call_operand.hbm [shape: f32[64,128], index: 5, kind: output, shape index: {}]
  %s6 = sld [smem:[#allocation0]]
  $region65: #{tpu_custom_call.1} parent=0
    _
  %s8 = ssub.s32 1, %s6
  %s9 = scalar_select 0, %s8, %s6
  $region1: #{tpu_custom_call.1} parent=0
    #allocation3 [shape = 'u8[16384]{0}', space=vmem, size = 0x4000, scoped, tag = 'input window, operand 0']
    #allocation4 [shape = 's32[2]{0}', space=sflag, size = 0x8, scoped, tag = 'scoped memory for tpu_custom_call.1']
    #allocation5 [shape = 's32[2]{0}', space=sflag, size = 0x8, scoped, tag = 'scoped memory for tpu_custom_call.1']
    #allocation6 [shape = 'u8[98304]{0}', space=vmem, size = 0x18000, scoped, tag = 'input window, operand 1, single buffered']
    #allocation7 [shape = 's32[1]{0}', space=sflag, size = 0x4, scoped, tag = 'scoped memory for tpu_custom_call.1']
    #allocation8 [shape = 'u8[98304]{0}', space=vmem, size = 0x18000, scoped, tag = 'input window, operand 3, single buffered']
    #allocation9 [shape = 'u8[32768]{0}', space=vmem, size = 0x8000, scoped, tag = 'output window, operand 0']
    %10 = vsyncpa [#allocation4], 0
    %s11 = scalar_lea.sflag [#allocation4], 1
    %12 = vsyncpa %s11, 0
    %13 = vsyncpa [#allocation7], 0
    %14 = vsyncpa [#allocation5], 0
    %s15 = scalar_lea.sflag [#allocation5], 1
    %16 = vsyncpa %s15, 0
    loop: start=0, step=1, limit=4
    $region2: #{tpu_custom_call.1} parent=1 // loop_pre_header
      _
    $region3: #{tpu_custom_call.1} parent=1 // loop_header
      %s18 = sphi 0, %s22
      %p19 = scmp.ge.s32.totalorder %s18, 4
      %s28 = sphi 0, %s30
      %s31 = sphi 0, %s28
      %s32 = sphi 0, %s31
      %s48 = sphi 0, %s32
      %s52 = sphi 0, %s52
      %s54 = sphi 0, %s52
      %s55 = sphi 0, %s54
      %s69 = sphi 0, %s55
      %s73 = sphi 0, %s73
      %s75 = sphi 0, %s73
      %s76 = sphi 0, %s75
      %s90 = sphi 0, %s76
      %s94 = sphi 0, %s94
      %s96 = sphi 0, %s94
      %s97 = sphi 0, %s96
      %s111 = sphi 0, %s97
      %s115 = sphi 0, %s115
      %s117 = sphi 0, %s115
      %s118 = sphi 0, %s117
      %s132 = sphi 0, %s118
      %s138 = sphi 0, %s140
      %s141 = sphi 0, %s138
      %s142 = sphi 0, %s141
      %s158 = sphi 0, %s142
    $region4: #{tpu_custom_call.1} parent=1 // loop_header_branch
      %21 = sbr.rel (%p19) target = $region8
    $region5: #{tpu_custom_call.1} parent=1 // loop_body
      %s23 = ssub.s32 %s18, 1
      %s24 = ssub.s32 %s18, 2
      %s25 = sadd.s32 %s18, 1
      %s26 = ssub.s32 %s18, %s25
      %p27 = scmp.eq.s32.totalorder %s26, 0
      %s29 = sadd.s32 %s28, 1
      %s30 = scalar_select %p27, %s28, %s29
      %p33 = pneg %p27
      %p34 = scmp.eq.s32.totalorder %s18, 1
      %p35 = por %p33, %p34
      %p36 = scmp.ne.s32.totalorder %s28, %s31
      %p37 = scmp.eq.s32.totalorder %s18, 0
      %p38 = por %p36, %p37
      %p39 = scmp.ne.s32.totalorder %s28, %s31
      %p40 = scmp.eq.s32.totalorder %s23, 1
      %p41 = por %p39, %p40
      %p42 = scmp.ne.s32.totalorder %s31, %s32
      %p43 = scmp.eq.s32.totalorder %s23, 0
      %p44 = por %p42, %p43
      %p45 = scmp.ne.s32.totalorder %s31, %s32
      %p46 = scmp.eq.s32.totalorder %s24, 1
      %p47 = por %p45, %p46
      %p49 = scmp.ne.s32.totalorder %s32, %s48
      %p50 = scmp.eq.s32.totalorder %s24, 0
      %p51 = por %p49, %p50
      %s53 = sadd.s32 %s52, 1
      %p56 = scmp.eq.s32.totalorder %s18, 1
      %p57 = scmp.ne.s32.totalorder %s52, %s54
      %p58 = scmp.eq.s32.totalorder %s18, 0
      %p59 = por %p57, %p58
      %p60 = scmp.ne.s32.totalorder %s52, %s54
      %p61 = scmp.eq.s32.totalorder %s23, 1
      %p62 = por %p60, %p61
      %p63 = scmp.ne.s32.totalorder %s54, %s55
      %p64 = scmp.eq.s32.totalorder %s23, 0
      %p65 = por %p63, %p64
      %p66 = scmp.ne.s32.totalorder %s54, %s55
      %p67 = scmp.eq.s32.totalorder %s24, 1
      %p68 = por %p66, %p67
      %p70 = scmp.ne.s32.totalorder %s55, %s69
      %p71 = scmp.eq.s32.totalorder %s24, 0
      %p72 = por %p70, %p71
      %s74 = sadd.s32 %s73, 1
      %p77 = scmp.eq.s32.totalorder %s18, 1
      %p78 = scmp.ne.s32.totalorder %s73, %s75
      %p79 = scmp.eq.s32.totalorder %s18, 0
      %p80 = por %p78, %p79
      %p81 = scmp.ne.s32.totalorder %s73, %s75
      %p82 = scmp.eq.s32.totalorder %s23, 1
      %p83 = por %p81, %p82
      %p84 = scmp.ne.s32.totalorder %s75, %s76
      %p85 = scmp.eq.s32.totalorder %s23, 0
      %p86 = por %p84, %p85
      %p87 = scmp.ne.s32.totalorder %s75, %s76
      %p88 = scmp.eq.s32.totalorder %s24, 1
      %p89 = por %p87, %p88
      %p91 = scmp.ne.s32.totalorder %s76, %s90
      %p92 = scmp.eq.s32.totalorder %s24, 0
      %p93 = por %p91, %p92
      %s95 = sadd.s32 %s94, 1
      %p98 = scmp.eq.s32.totalorder %s18, 1
      %p99 = scmp.ne.s32.totalorder %s94, %s96
      %p100 = scmp.eq.s32.totalorder %s18, 0
      %p101 = por %p99, %p100
      %p102 = scmp.ne.s32.totalorder %s94, %s96
      %p103 = scmp.eq.s32.totalorder %s23, 1
      %p104 = por %p102, %p103
      %p105 = scmp.ne.s32.totalorder %s96, %s97
      %p106 = scmp.eq.s32.totalorder %s23, 0
      %p107 = por %p105, %p106
      %p108 = scmp.ne.s32.totalorder %s96, %s97
      %p109 = scmp.eq.s32.totalorder %s24, 1
      %p110 = por %p108, %p109
      %p112 = scmp.ne.s32.totalorder %s97, %s111
      %p113 = scmp.eq.s32.totalorder %s24, 0
      %p114 = por %p112, %p113
      %s116 = sadd.s32 %s115, 1
      %p119 = scmp.eq.s32.totalorder %s18, 1
      %p120 = scmp.ne.s32.totalorder %s115, %s117
      %p121 = scmp.eq.s32.totalorder %s18, 0
      %p122 = por %p120, %p121
      %p123 = scmp.ne.s32.totalorder %s115, %s117
      %p124 = scmp.eq.s32.totalorder %s23, 1
      %p125 = por %p123, %p124
      %p126 = scmp.ne.s32.totalorder %s117, %s118
      %p127 = scmp.eq.s32.totalorder %s23, 0
      %p128 = por %p126, %p127
      %p129 = scmp.ne.s32.totalorder %s117, %s118
      %p130 = scmp.eq.s32.totalorder %s24, 1
      %p131 = por %p129, %p130
      %p133 = scmp.ne.s32.totalorder %s118, %s132
      %p134 = scmp.eq.s32.totalorder %s24, 0
      %p135 = por %p133, %p134
      %s136 = ssub.s32 %s18, %s25
      %p137 = scmp.eq.s32.totalorder %s136, 0
      %s139 = sadd.s32 %s138, 1
      %s140 = scalar_select %p137, %s138, %s139
      %p143 = pneg %p137
      %p144 = scmp.eq.s32.totalorder %s18, 1
      %p145 = por %p143, %p144
      %p146 = scmp.ne.s32.totalorder %s138, %s141
      %p147 = scmp.eq.s32.totalorder %s18, 0
      %p148 = por %p146, %p147
      %p149 = scmp.ne.s32.totalorder %s138, %s141
      %p150 = scmp.eq.s32.totalorder %s23, 1
      %p151 = por %p149, %p150
      %p152 = scmp.ne.s32.totalorder %s141, %s142
      %p153 = scmp.eq.s32.totalorder %s23, 0
      %p154 = por %p152, %p153
      %p155 = scmp.ne.s32.totalorder %s141, %s142
      %p156 = scmp.eq.s32.totalorder %s24, 1
      %p157 = por %p155, %p156
      %p159 = scmp.ne.s32.totalorder %s142, %s158
      %p160 = scmp.eq.s32.totalorder %s24, 0
      %p161 = por %p159, %p160
      %p162 = scmp.le.s32.totalorder 1, %s18
      %p163 = scmp.lt.s32.totalorder %s18, 3
      %p164 = pnand %p162, %p163
      %p165 = pneg %p164
      // Predicated region
      $region9: #{tpu_custom_call.1} parent=5 // pred_check
        _
      $region10: #{tpu_custom_call.1} parent=5 // pred_check_branch
        %167 = sbr.rel (%p164) target = $region12
      $region11: #{tpu_custom_call.1} parent=5 // pred_region
        %s168 = ssub.s32 %s18, 1
        // Predicated region
        $region13: #{tpu_custom_call.1} parent=11 // pred_check
          %p169 = pneg %p65
        $region14: #{tpu_custom_call.1} parent=11 // pred_check_branch
          %171 = sbr.rel (%p169) target = $region16
        $region15: #{tpu_custom_call.1} parent=11 // pred_region
          %s173 = ssub.s32 3072, 3072
          %174 = vsyncadd [#allocation7], %s173
          %s175 = sshll.u32 [#allocation6], 4
          %s176 = int_to_ptr.vmem [resolvable:$true] %s175
          %181 = dma.hbm_to_vmem [thread:$0]  %s1, 3072, %s176, [#allocation7], 64, 64, 4
        $region16: #{tpu_custom_call.1} parent=11 // pred_fallthru
          _
        // Predicated region
        $region17: #{tpu_custom_call.1} parent=11 // pred_check
          %p182 = pneg %p86
        $region18: #{tpu_custom_call.1} parent=11 // pred_check_branch
          %184 = sbr.rel (%p182) target = $region20
        $region19: #{tpu_custom_call.1} parent=11 // pred_region
          _
        $region20: #{tpu_custom_call.1} parent=11 // pred_fallthru
          _
        // Predicated region
        $region21: #{tpu_custom_call.1} parent=11 // pred_check
          %p185 = pneg %p107
        $region22: #{tpu_custom_call.1} parent=11 // pred_check_branch
          %187 = sbr.rel (%p185) target = $region24
        $region23: #{tpu_custom_call.1} parent=11 // pred_region
          %s189 = ssub.s32 3072, 3072
          %190 = vsyncadd [#allocation7], %s189
          %s191 = sshll.u32 [#allocation8], 4
          %s192 = int_to_ptr.vmem [resolvable:$true] %s191
          %197 = dma.hbm_to_vmem [thread:$0]  %s3, 3072, %s192, [#allocation7], 64, 64, 4
        $region24: #{tpu_custom_call.1} parent=11 // pred_fallthru
          _
        // Predicated region
        $region25: #{tpu_custom_call.1} parent=11 // pred_check
          %p198 = pneg %p128
        $region26: #{tpu_custom_call.1} parent=11 // pred_check_branch
          %200 = sbr.rel (%p198) target = $region28
        $region27: #{tpu_custom_call.1} parent=11 // pred_region
          _
        $region28: #{tpu_custom_call.1} parent=11 // pred_fallthru
          _
      $region12: #{tpu_custom_call.1} parent=5 // pred_fallthru
        _
      %p201 = scmp.lt.s32.totalorder %s18, 2
      // Predicated region
      $region29: #{tpu_custom_call.1} parent=5 // pred_check
        %p202 = pneg %p201
      $region30: #{tpu_custom_call.1} parent=5 // pred_check_branch
        %204 = sbr.rel (%p202) target = $region32
      $region31: #{tpu_custom_call.1} parent=5 // pred_region
        // Predicated region
        $region33: #{tpu_custom_call.1} parent=31 // pred_check
          %p205 = pneg %p38
        $region34: #{tpu_custom_call.1} parent=31 // pred_check_branch
          %207 = sbr.rel (%p205) target = $region36
        $region35: #{tpu_custom_call.1} parent=31 // pred_region
          %s208 = sand.u32 %s28, 1
          %s209 = scalar_lea.sflag [#allocation4], %s208
          %s210 = sand.u32 %s28, 1
          %s211 = smul.addr %s210, 16
          %s212 = scalar_lea.vmem [#allocation3], %s211
          %s213 = smul.u32 4, %s18
          %s215 = ssub.s32 256, 256
          %216 = vsyncadd %s209, %s215
          %s217 = smul.addr %s213, 64
          %s218 = scalar_lea.hbm %s0, %s217
          %s219 = sshll.u32 %s212, 4
          %s220 = int_to_ptr.vmem [resolvable:$true] %s219
          %225 = dma.hbm_to_vmem [thread:$0]  %s218, 256, %s220, %s209, 64, 64, 4
        $region36: #{tpu_custom_call.1} parent=31 // pred_fallthru
          _
      $region32: #{tpu_custom_call.1} parent=5 // pred_fallthru
        _
      %p226 = scmp.le.s32.totalorder 1, %s18
      %p227 = scmp.lt.s32.totalorder %s18, 3
      %p228 = pnand %p226, %p227
      %p229 = pneg %p228
      // Predicated region
      $region37: #{tpu_custom_call.1} parent=5 // pred_check
        _
      $region38: #{tpu_custom_call.1} parent=5 // pred_check_branch
        %231 = sbr.rel (%p228) target = $region40
      $region39: #{tpu_custom_call.1} parent=5 // pred_region
        %s232 = ssub.s32 %s18, 1
        %s233 = sand.u32 %s31, 1
        %s234 = scalar_lea.sflag [#allocation4], %s233
        %s235 = sand.u32 %s31, 1
        %s236 = smul.addr %s235, 16
        %s237 = scalar_lea.vmem [#allocation3], %s236
        // Predicated region
        $region41: #{tpu_custom_call.1} parent=39 // pred_check
          %p238 = pneg %p44
        $region42: #{tpu_custom_call.1} parent=39 // pred_check_branch
          %240 = sbr.rel (%p238) target = $region44
        $region43: #{tpu_custom_call.1} parent=39 // pred_region
          %241 = dma.done %s234, 256
        $region44: #{tpu_custom_call.1} parent=39 // pred_fallthru
          _
        // Predicated region
        $region45: #{tpu_custom_call.1} parent=39 // pred_check
          %p242 = pneg %p65
        $region46: #{tpu_custom_call.1} parent=39 // pred_check_branch
          %244 = sbr.rel (%p242) target = $region48
        $region47: #{tpu_custom_call.1} parent=39 // pred_region
          %245 = dma.done [#allocation7], 3072
        $region48: #{tpu_custom_call.1} parent=39 // pred_fallthru
          _
        // Predicated region
        $region49: #{tpu_custom_call.1} parent=39 // pred_check
          %p246 = pneg %p107
        $region50: #{tpu_custom_call.1} parent=39 // pred_check_branch
          %248 = sbr.rel (%p246) target = $region52
        $region51: #{tpu_custom_call.1} parent=39 // pred_region
          %249 = dma.done [#allocation7], 3072
        $region52: #{tpu_custom_call.1} parent=39 // pred_fallthru
          _
        %s250 = sand.u32 %s31, 1
        %s251 = scalar_lea.sflag [#allocation4], %s250
        %s252 = sand.u32 %s31, 1
        %s253 = smul.addr %s252, 16
        %s254 = scalar_lea.vmem [#allocation3], %s253
        %p255 = pneg %p44
        %p256 = pneg %p41
        %p257 = pneg %p65
        %p258 = pneg %p62
        %p259 = pneg %p86
        %p260 = pneg %p83
        %p261 = pneg %p107
        %p262 = pneg %p104
        %p263 = pneg %p128
        %p264 = pneg %p125
        %p265 = pneg %p154
        %p266 = pneg %p151
        %s267 = sand.u32 %s141, 1
        %s268 = scalar_lea.sflag [#allocation5], %s267
        %s269 = sand.u32 %s141, 1
        %s270 = smul.addr %s269, 32
        %s271 = scalar_lea.vmem [#allocation9], %s270
        %s272 = smul.u32 4, %s23
        %s273 = smul.u32 4, %s23
        %vm275 = vcmask 1040384
        %vm276 = vsmask.f32 256
        %vm277 = vmand %vm275, %vm276
        %v278 = vld [vmem:[#allocation2] sm:$0x1]
        %v279 = vsel %vm277, 0, %v278
        %280 = vst [vmem:[#allocation2] sm:$0x1] %v279
        %vm281 = vcmask 1043459
        %vm282 = vsmask.f32 7950
        %vm283 = vmand %vm281, %vm282
        %v284 = vld [vmem:[#allocation2 + $0x14] sm:$0x8]
        %v285 = vsel %vm283, 0, %v284
        %286 = vst [vmem:[#allocation2 + $0x14] sm:$0x8] %v285
        %v287 = vld [vmem:[#allocation2 + $0x18] sm:$0x1]
        %v288 = vsel %vm277, 0, %v287
        %289 = vst [vmem:[#allocation2 + $0x18] sm:$0x1] %v288
        %v290 = vld [vmem:[#allocation2 + $0x2c] sm:$0x8]
        %v291 = vsel %vm283, 0, %v290
        %292 = vst [vmem:[#allocation2 + $0x2c] sm:$0x8] %v291
        %v293 = vld [vmem:[%s237] sm:$0xf]
        %v294 = vld [vmem:[%s237 + $0x4] sm:$0xf]
        %v295 = vld [vmem:[%s237 + $0x8] sm:$0xf]
        %v296 = vld [vmem:[%s237 + $0xc] sm:$0xf]
        %297 = vst [vmem:[#allocation2 + $0x4] sm:$0xf] %v293
        %298 = vst [vmem:[#allocation2 + $0x10] sm:$0xf] %v294
        %299 = vst [vmem:[#allocation2 + $0x1c] sm:$0xf] %v295
        %300 = vst [vmem:[#allocation2 + $0x28] sm:$0xf] %v296
        %v301 = vld [vmem:[%s237] sm:$0xf]
        %v302 = vld [vmem:[%s237 + $0x4] sm:$0xf]
        %vm303 = vsmask.f32 4368
        %vm304 = vmor %vm276, %vm303
        %v306 = vshrl.u32 %v301, 16
        %v308 = vrot.slane %v306, 7
        %v309 = vshll.u32 %v301, 16
        %v311 = vor.u32 %v308, %v309
        %v312 = vrot.slane %v308, 4
        %v314 = vshrl.u32 %v302, 16
        %v316 = vrot.slane %v314, 7
        %v317 = vshll.u32 %v302, 16
        %v319 = vor.u32 %v316, %v317
        %v320 = vsel %vm304, %v312, %v319
        %vm323 = vcmask 1043456
        %vm324 = vsmask.f32 7938
        %vm325 = vmand %vm323, %vm324
        %v326 = vld [vmem:[#allocation2] sm:$0xf]
        %v327 = vsel %vm325, %v311, %v326
        %328 = vst [vmem:[#allocation2] sm:$0xf] %v327
        %329 = vst [vmem:[#allocation2 + $0xc] sm:$0xf] %v320
        %v330 = vld [vmem:[%s237] sm:$0xf]
        %v331 = vld [vmem:[%s237 + $0x4] sm:$0xf]
        %vm332 = vsmask.f32 3328
        %vm333 = vsmask.f32 7440
        %vm334 = vmor %vm332, %vm333
        %v336 = vshrl.u32 %v330, 16
        %v338 = vrot.slane %v336, 4
        %v339 = vshll.u32 %v330, 16
        %v341 = vrot.slane %v339, 5
        %v342 = vor.u32 %v338, %v341
        %v343 = vrot.slane %v342, 4
        %v345 = vshll.u32 %v331, 16
        %v347 = vrot.slane %v345, 5
        %v348 = vsel %vm334, %v343, %v347
        %v349 = vshrl.u32 %v331, 16
        %v351 = vrot.slane %v349, 4
        %v352 = vor.u32 %v351, %v347
        %v353 = vrot.slane %v352, 4
        %356 = vst [vmem:[#allocation2 + $0x8] sm:$0xf] %v348
        %vm357 = vmand %vm323, %vm332
        %v358 = vld [vmem:[#allocation2 + $0x14] sm:$0xf]
        %v359 = vsel %vm357, %v353, %v358
        %360 = vst [vmem:[#allocation2 + $0x14] sm:$0xf] %v359
        %v361 = vld [vmem:[%s237 + $0x8] sm:$0xf]
        %v362 = vld [vmem:[%s237 + $0xc] sm:$0xf]
        %v364 = vshrl.u32 %v361, 16
        %v366 = vrot.slane %v364, 7
        %v367 = vshll.u32 %v361, 16
        %v369 = vor.u32 %v366, %v367
        %v370 = vrot.slane %v366, 4
        %v372 = vshrl.u32 %v362, 16
        %v374 = vrot.slane %v372, 7
        %v375 = vshll.u32 %v362, 16
        %v377 = vor.u32 %v374, %v375
        %v378 = vsel %vm304, %v370, %v377
        %v381 = vld [vmem:[#allocation2 + $0x18] sm:$0xf]
        %v382 = vsel %vm325, %v369, %v381
        %383 = vst [vmem:[#allocation2 + $0x18] sm:$0xf] %v382
        %384 = vst [vmem:[#allocation2 + $0x24] sm:$0xf] %v378
        %v385 = vld [vmem:[%s237 + $0x8] sm:$0xf]
        %v386 = vld [vmem:[%s237 + $0xc] sm:$0xf]
        %v388 = vshrl.u32 %v385, 16
        %v390 = vrot.slane %v388, 4
        %v391 = vshll.u32 %v385, 16
        %v393 = vrot.slane %v391, 5
        %v394 = vor.u32 %v390, %v393
        %v395 = vrot.slane %v394, 4
        %v397 = vshll.u32 %v386, 16
        %v399 = vrot.slane %v397, 5
        %v400 = vsel %vm334, %v395, %v399
        %v401 = vshrl.u32 %v386, 16
        %v403 = vrot.slane %v401, 4
        %v404 = vor.u32 %v403, %v399
        %v405 = vrot.slane %v404, 4
        %408 = vst [vmem:[#allocation2 + $0x20] sm:$0xf] %v400
        %v409 = vld [vmem:[#allocation2 + $0x2c] sm:$0xf]
        %v410 = vsel %vm357, %v405, %v409
        %411 = vst [vmem:[#allocation2 + $0x2c] sm:$0xf] %v410
        %v412 = vld [vmem:[#allocation2] sm:$0xff]
        %v413 = vld [vmem:[#allocation2 + $0x8] sm:$0xf]
        %v414 = vld [vmem:[#allocation2 + $0xc] sm:$0xff]
        %v415 = vld [vmem:[#allocation2 + $0x14] sm:$0xf]
        %v416 = vld [vmem:[#allocation2 + $0x18] sm:$0xff]
        %v417 = vld [vmem:[#allocation2 + $0x20] sm:$0xf]
        %v418 = vld [vmem:[#allocation2 + $0x24] sm:$0xff]
        %v419 = vld [vmem:[#allocation2 + $0x2c] sm:$0xf]
        %v420 = vld [vmem:[#allocation6] sm:$0xf]
        %v421 = vld [vmem:[#allocation6 + $0x4] sm:$0xf]
        %v422 = vld [vmem:[#allocation6 + $0x8] sm:$0xf]
        %v423 = vld [vmem:[#allocation6 + $0xc] sm:$0xf]
        %v424 = vld [vmem:[#allocation6 + $0x10] sm:$0xf]
        %v425 = vld [vmem:[#allocation6 + $0x14] sm:$0xf]
        %v426 = vld [vmem:[#allocation6 + $0x18] sm:$0xf]
        %v427 = vld [vmem:[#allocation6 + $0x1c] sm:$0xf]
        %v428 = vld [vmem:[#allocation6 + $0x20] sm:$0xf]
        %v429 = vld [vmem:[#allocation6 + $0x24] sm:$0xf]
        %v430 = vld [vmem:[#allocation6 + $0x28] sm:$0xf]
        %v431 = vld [vmem:[#allocation6 + $0x2c] sm:$0xf]
        %v432 = vld [vmem:[#allocation6 + $0x30] sm:$0xf]
        %v433 = vld [vmem:[#allocation6 + $0x34] sm:$0xf]
        %v434 = vld [vmem:[#allocation6 + $0x38] sm:$0xf]
        %v435 = vld [vmem:[#allocation6 + $0x3c] sm:$0xf]
        %v436 = vld [vmem:[#allocation6 + $0x40] sm:$0xf]
        %v437 = vld [vmem:[#allocation6 + $0x44] sm:$0xf]
        %v438 = vld [vmem:[#allocation6 + $0x48] sm:$0xf]
        %v439 = vld [vmem:[#allocation6 + $0x4c] sm:$0xf]
        %v440 = vld [vmem:[#allocation6 + $0x50] sm:$0xf]
        %v441 = vld [vmem:[#allocation6 + $0x54] sm:$0xf]
        %v442 = vld [vmem:[#allocation6 + $0x58] sm:$0xf]
        %v443 = vld [vmem:[#allocation6 + $0x5c] sm:$0xf]
        %v444 = vld [vmem:[#allocation6 + $0x60] sm:$0xf]
        %v445 = vld [vmem:[#allocation6 + $0x64] sm:$0xf]
        %v446 = vld [vmem:[#allocation6 + $0x68] sm:$0xf]
        %v447 = vld [vmem:[#allocation6 + $0x6c] sm:$0xf]
        %v448 = vld [vmem:[#allocation6 + $0x70] sm:$0xf]
        %v449 = vld [vmem:[#allocation6 + $0x74] sm:$0xf]
        %v450 = vld [vmem:[#allocation6 + $0x78] sm:$0xf]
        %v451 = vld [vmem:[#allocation6 + $0x7c] sm:$0xf]
        %v452 = vld [vmem:[#allocation6 + $0x80] sm:$0xf]
        %v453 = vld [vmem:[#allocation6 + $0x84] sm:$0xf]
        %v454 = vld [vmem:[#allocation6 + $0x88] sm:$0xf]
        %v455 = vld [vmem:[#allocation6 + $0x8c] sm:$0xf]
        %v456 = vld [vmem:[#allocation6 + $0x90] sm:$0xf]
        %v457 = vld [vmem:[#allocation6 + $0x94] sm:$0xf]
        %v458 = vld [vmem:[#allocation6 + $0x98] sm:$0xf]
        %v459 = vld [vmem:[#allocation6 + $0x9c] sm:$0xf]
        %v460 = vld [vmem:[#allocation6 + $0xa0] sm:$0xf]
        %v461 = vld [vmem:[#allocation6 + $0xa4] sm:$0xf]
        %v462 = vld [vmem:[#allocation6 + $0xa8] sm:$0xf]
        %v463 = vld [vmem:[#allocation6 + $0xac] sm:$0xf]
        %v464 = vld [vmem:[#allocation6 + $0xb0] sm:$0xf]
        %v465 = vld [vmem:[#allocation6 + $0xb4] sm:$0xf]
        %v466 = vld [vmem:[#allocation6 + $0xb8] sm:$0xf]
        %v467 = vld [vmem:[#allocation6 + $0xbc] sm:$0xf]
        %v468 = vld [vmem:[%s2] sm:$0x1]
        %v470 = vlaneseq
        %v471 = vshrl.u32 %v470, 7
        %v472 = vsub.s32 0, %v471
        %v473 = vrot.slane %v468, %v472
        %v483 = vunpack.c.l.b16 %v412
        %v484 = vunpack.c.h.b16 %v412
        %v485 = vunpack.c.l.b16 %v413
        %v486 = vunpack.c.l.b16 %v414
        %v487 = vunpack.c.h.b16 %v414
        %v488 = vunpack.c.l.b16 %v415
        %v489 = vunpack.c.l.b16 %v416
        %v490 = vunpack.c.h.b16 %v416
        %v491 = vunpack.c.l.b16 %v417
        %v492 = vunpack.c.l.b16 %v418
        %v493 = vunpack.c.h.b16 %v418
        %v494 = vunpack.c.l.b16 %v419
        %v495 = vpack.c.b16 %v486, %v483
        %v496 = vpack.c.b16 %v487, %v484
        %v497 = vpack.c.b16 %v488, %v485
        %v498 = vpack.c.b16 %v492, %v489
        %v499 = vpack.c.b16 %v493, %v490
        %v500 = vpack.c.b16 %v494, %v491
        %v555 = vunpack.c.l.b16 %v420
        %v556 = vunpack.c.l.b16 %v421
        %v557 = vunpack.c.l.b16 %v422
        %v558 = vunpack.c.l.b16 %v423
        %v559 = vunpack.c.l.b16 %v424
        %v560 = vunpack.c.l.b16 %v425
        %v561 = vunpack.c.l.b16 %v426
        %v562 = vunpack.c.l.b16 %v427
        %v563 = vunpack.c.l.b16 %v428
        %v564 = vunpack.c.l.b16 %v429
        %v565 = vunpack.c.l.b16 %v430
        %v566 = vunpack.c.l.b16 %v431
        %v567 = vunpack.c.l.b16 %v432
        %v568 = vunpack.c.l.b16 %v433
        %v569 = vunpack.c.l.b16 %v434
        %v570 = vunpack.c.l.b16 %v435
        %v571 = vunpack.c.l.b16 %v436
        %v572 = vunpack.c.l.b16 %v437
        %v573 = vunpack.c.l.b16 %v438
        %v574 = vunpack.c.l.b16 %v439
        %v575 = vunpack.c.l.b16 %v440
        %v576 = vunpack.c.l.b16 %v441
        %v577 = vunpack.c.l.b16 %v442
        %v578 = vunpack.c.l.b16 %v443
        %v579 = vunpack.c.l.b16 %v444
        %v580 = vunpack.c.l.b16 %v445
        %v581 = vunpack.c.l.b16 %v446
        %v582 = vunpack.c.l.b16 %v447
        %v583 = vunpack.c.l.b16 %v448
        %v584 = vunpack.c.l.b16 %v449
        %v585 = vunpack.c.l.b16 %v450
        %v586 = vunpack.c.l.b16 %v451
        %v587 = vunpack.c.l.b16 %v452
        %v588 = vunpack.c.l.b16 %v453
        %v589 = vunpack.c.l.b16 %v454
        %v590 = vunpack.c.l.b16 %v455
        %v591 = vunpack.c.l.b16 %v456
        %v592 = vunpack.c.l.b16 %v457
        %v593 = vunpack.c.l.b16 %v458
        %v594 = vunpack.c.l.b16 %v459
        %v595 = vunpack.c.l.b16 %v460
        %v596 = vunpack.c.l.b16 %v461
        %v597 = vunpack.c.l.b16 %v462
        %v598 = vunpack.c.l.b16 %v463
        %v599 = vunpack.c.l.b16 %v464
        %v600 = vunpack.c.l.b16 %v465
        %v601 = vunpack.c.l.b16 %v466
        %v602 = vunpack.c.l.b16 %v467
        %v603 = vpack.c.b16 %v556, %v555
        %v604 = vpack.c.b16 %v558, %v557
        %v605 = vpack.c.b16 %v560, %v559
        %v606 = vpack.c.b16 %v562, %v561
        %v607 = vpack.c.b16 %v564, %v563
        %v608 = vpack.c.b16 %v566, %v565
        %v609 = vpack.c.b16 %v568, %v567
        %v610 = vpack.c.b16 %v570, %v569
        %v611 = vpack.c.b16 %v572, %v571
        %v612 = vpack.c.b16 %v574, %v573
        %v613 = vpack.c.b16 %v576, %v575
        %v614 = vpack.c.b16 %v578, %v577
        %v615 = vpack.c.b16 %v580, %v579
        %v616 = vpack.c.b16 %v582, %v581
        %v617 = vpack.c.b16 %v584, %v583
        %v618 = vpack.c.b16 %v586, %v585
        %v619 = vpack.c.b16 %v588, %v587
        %v620 = vpack.c.b16 %v590, %v589
        %v621 = vpack.c.b16 %v592, %v591
        %v622 = vpack.c.b16 %v594, %v593
        %v623 = vpack.c.b16 %v596, %v595
        %v624 = vpack.c.b16 %v598, %v597
        %v625 = vpack.c.b16 %v600, %v599
        %v626 = vpack.c.b16 %v602, %v601
        %651 = vmatprep.subr.bf16.mxu0 0
        %652 = vmatpush1.bf16.msra.mxu0 %v610
        %653 = vmatprep.subr.bf16.mxu0 0
        %654 = vmatpush1.bf16.msra.mxu0 %v609
        %655 = vmatprep.subr.bf16.mxu0 0
        %656 = vmatpush1.bf16.msra.mxu0 %v608
        %657 = vmatprep.subr.bf16.mxu0 0
        %658 = vmatpush1.bf16.msra.mxu0 %v607
        %659 = vmatprep.subr.bf16.mxu0 0
        %660 = vmatpush1.bf16.msra.mxu0 %v606
        %661 = vmatprep.subr.bf16.mxu0 0
        %662 = vmatpush1.bf16.msra.mxu0 %v605
        %663 = vmatprep.subr.bf16.mxu0 0
        %664 = vmatpush1.bf16.msra.mxu0 %v604
        %665 = vmatprep.subr.bf16.mxu0 0
        %666 = vmatpush1.bf16.msra.mxu0 %v603
        %667 = vmatprep.subr.bf16.mxu0 0
        %668 = vmatpush2.bf16.msra.mxu0 %v618
        %669 = vmatprep.subr.bf16.mxu0 0
        %670 = vmatpush2.bf16.msra.mxu0 %v617
        %671 = vmatprep.subr.bf16.mxu0 0
        %672 = vmatpush2.bf16.msra.mxu0 %v616
        %673 = vmatprep.subr.bf16.mxu0 0
        %674 = vmatpush2.bf16.msra.mxu0 %v615
        %675 = vmatprep.subr.bf16.mxu0 0
        %676 = vmatpush2.bf16.msra.mxu0 %v614
        %677 = vmatprep.subr.bf16.mxu0 0
        %678 = vmatpush2.bf16.msra.mxu0 %v613
        %679 = vmatprep.subr.bf16.mxu0 0
        %680 = vmatpush2.bf16.msra.mxu0 %v612
        %681 = vmatprep.subr.bf16.mxu0 0
        %682 = vmatpush2.bf16.msra.mxu0 %v611
        %683 = vmatprep.mubr.bf16.mxu0 %v496
        %684 = vmatmul.mubr.bf16.gmra.mxu0 %v495
        %v685 = vpop.f32.mrf.mxu0
        %v686 = vadd.f32 %v473, %v685
        %v687 = vpop.f32.mrf.mxu0
        %v688 = vpop.f32.mrf.mxu0
        %v689 = vadd.f32 %v473, %v688
        %v690 = vpop.f32.mrf.mxu0
        %691 = vmatprep.mubr.bf16.mxu0 %v499
        %692 = vmatmul.mubr.bf16.gmra.mxu0 %v498
        %v693 = vpop.f32.mrf.mxu0
        %v694 = vadd.f32 %v473, %v693
        %v695 = vpop.f32.mrf.mxu0
        %v696 = vpop.f32.mrf.mxu0
        %v697 = vadd.f32 %v473, %v696
        %v698 = vpop.f32.mrf.mxu0
        %699 = vdwg.mxu0
        %700 = vmatprep.subr.bf16.mxu0 0
        %701 = vmatpush1.bf16.msra.mxu0 %v626
        %702 = vmatprep.subr.bf16.mxu0 0
        %703 = vmatpush1.bf16.msra.mxu0 %v625
        %704 = vmatprep.subr.bf16.mxu0 0
        %705 = vmatpush1.bf16.msra.mxu0 %v624
        %706 = vmatprep.subr.bf16.mxu0 0
        %707 = vmatpush1.bf16.msra.mxu0 %v623
        %708 = vmatprep.subr.bf16.mxu0 0
        %709 = vmatpush1.bf16.msra.mxu0 %v622
        %710 = vmatprep.subr.bf16.mxu0 0
        %711 = vmatpush1.bf16.msra.mxu0 %v621
        %712 = vmatprep.subr.bf16.mxu0 0
        %713 = vmatpush1.bf16.msra.mxu0 %v620
        %714 = vmatprep.subr.bf16.mxu0 0
        %715 = vmatpush1.bf16.msra.mxu0 %v619
        %716 = vmatprep.subr.bf16.mxu0 0
        %717 = vmatpush2.bf16.msra.mxu0 0
        %718 = vmatprep.subr.bf16.mxu0 0
        %719 = vmatpush2.bf16.msra.mxu0 0
        %720 = vmatprep.subr.bf16.mxu0 0
        %721 = vmatpush2.bf16.msra.mxu0 0
        %722 = vmatprep.subr.bf16.mxu0 0
        %723 = vmatpush2.bf16.msra.mxu0 0
        %724 = vmatprep.subr.bf16.mxu0 0
        %725 = vmatpush2.bf16.msra.mxu0 0
        %726 = vmatprep.subr.bf16.mxu0 0
        %727 = vmatpush2.bf16.msra.mxu0 0
        %728 = vmatprep.subr.bf16.mxu0 0
        %729 = vmatpush2.bf16.msra.mxu0 0
        %730 = vmatprep.subr.bf16.mxu0 0
        %731 = vmatpush2.bf16.msra.mxu0 0
        %732 = vmatprep.mubr.bf16.mxu0 0
        %733 = vmatmul.mubr.bf16.gmra.mxu0 %v497
        %v734 = vpop.f32.mrf.mxu0
        %v735 = vadd.f32 %v686, %v734
        %v736 = vpop.f32.mrf.mxu0
        %v737 = vpop.f32.mrf.mxu0
        %v738 = vadd.f32 %v689, %v737
        %v739 = vpop.f32.mrf.mxu0
        %740 = vmatprep.mubr.bf16.mxu0 0
        %741 = vmatmul.mubr.bf16.gmra.mxu0 %v500
        %v742 = vpop.f32.mrf.mxu0
        %v743 = vadd.f32 %v694, %v742
        %v744 = vpop.f32.mrf.mxu0
        %v745 = vpop.f32.mrf.mxu0
        %v746 = vadd.f32 %v697, %v745
        %v747 = vpop.f32.mrf.mxu0
        %748 = vdwg.mxu0
        %v749 = vmax.f32 %v735, 0.0
        %v750 = vmax.f32 %v738, 0.0
        %v751 = vmax.f32 %v743, 0.0
        %v752 = vmax.f32 %v746, 0.0
        %v753 = vpack.c.bf16 %v750, %v749
        %v754 = vpack.c.bf16 %v752, %v751
        %v757 = vunpack.c.l.b16 %v753
        %v758 = vunpack.c.h.b16 %v753
        %v759 = vunpack.c.l.b16 %v754
        %v760 = vunpack.c.h.b16 %v754
        %v761 = vpack.c.b16 %v757, %v757
        %v762 = vpack.c.b16 %v758, %v758
        %v763 = vpack.c.b16 %v759, %v759
        %v764 = vpack.c.b16 %v760, %v760
        %769 = vst [vmem:[#allocation2 + $0x4] sm:$0xf] %v761
        %770 = vst [vmem:[#allocation2 + $0x10] sm:$0xf] %v762
        %771 = vst [vmem:[#allocation2 + $0x1c] sm:$0xf] %v763
        %772 = vst [vmem:[#allocation2 + $0x28] sm:$0xf] %v764
        %v774 = vshrl.u32 %v761, 16
        %v776 = vrot.slane %v774, 7
        %v777 = vshll.u32 %v761, 16
        %v779 = vor.u32 %v776, %v777
        %v780 = vrot.slane %v776, 4
        %v782 = vshrl.u32 %v762, 16
        %v784 = vrot.slane %v782, 7
        %v785 = vshll.u32 %v762, 16
        %v787 = vor.u32 %v784, %v785
        %v788 = vsel %vm304, %v780, %v787
        %v791 = vld [vmem:[#allocation2] sm:$0xf]
        %v792 = vsel %vm325, %v779, %v791
        %793 = vst [vmem:[#allocation2] sm:$0xf] %v792
        %794 = vst [vmem:[#allocation2 + $0xc] sm:$0xf] %v788
        %v795 = vrot.slane %v774, 4
        %v796 = vrot.slane %v777, 5
        %v797 = vor.u32 %v795, %v796
        %v798 = vrot.slane %v797, 4
        %v799 = vrot.slane %v785, 5
        %v800 = vsel %vm334, %v798, %v799
        %v801 = vrot.slane %v782, 4
        %v802 = vor.u32 %v801, %v799
        %v803 = vrot.slane %v802, 4
        %806 = vst [vmem:[#allocation2 + $0x8] sm:$0xf] %v800
        %v807 = vld [vmem:[#allocation2 + $0x14] sm:$0xf]
        %v808 = vsel %vm357, %v803, %v807
        %809 = vst [vmem:[#allocation2 + $0x14] sm:$0xf] %v808
        %v811 = vshrl.u32 %v763, 16
        %v813 = vrot.slane %v811, 7
        %v814 = vshll.u32 %v763, 16
        %v816 = vor.u32 %v813, %v814
        %v817 = vrot.slane %v813, 4
        %v819 = vshrl.u32 %v764, 16
        %v821 = vrot.slane %v819, 7
        %v822 = vshll.u32 %v764, 16
        %v824 = vor.u32 %v821, %v822
        %v825 = vsel %vm304, %v817, %v824
        %v828 = vld [vmem:[#allocation2 + $0x18] sm:$0xf]
        %v829 = vsel %vm325, %v816, %v828
        %830 = vst [vmem:[#allocation2 + $0x18] sm:$0xf] %v829
        %831 = vst [vmem:[#allocation2 + $0x24] sm:$0xf] %v825
        %v832 = vrot.slane %v811, 4
        %v833 = vrot.slane %v814, 5
        %v834 = vor.u32 %v832, %v833
        %v835 = vrot.slane %v834, 4
        %v836 = vrot.slane %v822, 5
        %v837 = vsel %vm334, %v835, %v836
        %v838 = vrot.slane %v819, 4
        %v839 = vor.u32 %v838, %v836
        %v840 = vrot.slane %v839, 4
        %843 = vst [vmem:[#allocation2 + $0x20] sm:$0xf] %v837
        %v844 = vld [vmem:[#allocation2 + $0x2c] sm:$0xf]
        %v845 = vsel %vm357, %v840, %v844
        %846 = vst [vmem:[#allocation2 + $0x2c] sm:$0xf] %v845
        %v847 = vld [vmem:[#allocation2] sm:$0xff]
        %v848 = vld [vmem:[#allocation2 + $0x8] sm:$0xf]
        %v849 = vld [vmem:[#allocation2 + $0xc] sm:$0xff]
        %v850 = vld [vmem:[#allocation2 + $0x14] sm:$0xf]
        %v851 = vld [vmem:[#allocation2 + $0x18] sm:$0xff]
        %v852 = vld [vmem:[#allocation2 + $0x20] sm:$0xf]
        %v853 = vld [vmem:[#allocation2 + $0x24] sm:$0xff]
        %v854 = vld [vmem:[#allocation2 + $0x2c] sm:$0xf]
        %v855 = vld [vmem:[#allocation8] sm:$0xf]
        %v856 = vld [vmem:[#allocation8 + $0x4] sm:$0xf]
        %v857 = vld [vmem:[#allocation8 + $0x8] sm:$0xf]
        %v858 = vld [vmem:[#allocation8 + $0xc] sm:$0xf]
        %v859 = vld [vmem:[#allocation8 + $0x10] sm:$0xf]
        %v860 = vld [vmem:[#allocation8 + $0x14] sm:$0xf]
        %v861 = vld [vmem:[#allocation8 + $0x18] sm:$0xf]
        %v862 = vld [vmem:[#allocation8 + $0x1c] sm:$0xf]
        %v863 = vld [vmem:[#allocation8 + $0x20] sm:$0xf]
        %v864 = vld [vmem:[#allocation8 + $0x24] sm:$0xf]
        %v865 = vld [vmem:[#allocation8 + $0x28] sm:$0xf]
        %v866 = vld [vmem:[#allocation8 + $0x2c] sm:$0xf]
        %v867 = vld [vmem:[#allocation8 + $0x30] sm:$0xf]
        %v868 = vld [vmem:[#allocation8 + $0x34] sm:$0xf]
        %v869 = vld [vmem:[#allocation8 + $0x38] sm:$0xf]
        %v870 = vld [vmem:[#allocation8 + $0x3c] sm:$0xf]
        %v871 = vld [vmem:[#allocation8 + $0x40] sm:$0xf]
        %v872 = vld [vmem:[#allocation8 + $0x44] sm:$0xf]
        %v873 = vld [vmem:[#allocation8 + $0x48] sm:$0xf]
        %v874 = vld [vmem:[#allocation8 + $0x4c] sm:$0xf]
        %v875 = vld [vmem:[#allocation8 + $0x50] sm:$0xf]
        %v876 = vld [vmem:[#allocation8 + $0x54] sm:$0xf]
        %v877 = vld [vmem:[#allocation8 + $0x58] sm:$0xf]
        %v878 = vld [vmem:[#allocation8 + $0x5c] sm:$0xf]
        %v879 = vld [vmem:[#allocation8 + $0x60] sm:$0xf]
        %v880 = vld [vmem:[#allocation8 + $0x64] sm:$0xf]
        %v881 = vld [vmem:[#allocation8 + $0x68] sm:$0xf]
        %v882 = vld [vmem:[#allocation8 + $0x6c] sm:$0xf]
        %v883 = vld [vmem:[#allocation8 + $0x70] sm:$0xf]
        %v884 = vld [vmem:[#allocation8 + $0x74] sm:$0xf]
        %v885 = vld [vmem:[#allocation8 + $0x78] sm:$0xf]
        %v886 = vld [vmem:[#allocation8 + $0x7c] sm:$0xf]
        %v887 = vld [vmem:[#allocation8 + $0x80] sm:$0xf]
        %v888 = vld [vmem:[#allocation8 + $0x84] sm:$0xf]
        %v889 = vld [vmem:[#allocation8 + $0x88] sm:$0xf]
        %v890 = vld [vmem:[#allocation8 + $0x8c] sm:$0xf]
        %v891 = vld [vmem:[#allocation8 + $0x90] sm:$0xf]
        %v892 = vld [vmem:[#allocation8 + $0x94] sm:$0xf]
        %v893 = vld [vmem:[#allocation8 + $0x98] sm:$0xf]
        %v894 = vld [vmem:[#allocation8 + $0x9c] sm:$0xf]
        %v895 = vld [vmem:[#allocation8 + $0xa0] sm:$0xf]
        %v896 = vld [vmem:[#allocation8 + $0xa4] sm:$0xf]
        %v897 = vld [vmem:[#allocation8 + $0xa8] sm:$0xf]
        %v898 = vld [vmem:[#allocation8 + $0xac] sm:$0xf]
        %v899 = vld [vmem:[#allocation8 + $0xb0] sm:$0xf]
        %v900 = vld [vmem:[#allocation8 + $0xb4] sm:$0xf]
        %v901 = vld [vmem:[#allocation8 + $0xb8] sm:$0xf]
        %v902 = vld [vmem:[#allocation8 + $0xbc] sm:$0xf]
        %v903 = vld [vmem:[%s4] sm:$0x1]
        %v905 = vlaneseq
        %v906 = vshrl.u32 %v905, 7
        %v907 = vsub.s32 0, %v906
        %v908 = vrot.slane %v903, %v907
        %v918 = vunpack.c.l.b16 %v847
        %v919 = vunpack.c.h.b16 %v847
        %v920 = vunpack.c.l.b16 %v848
        %v921 = vunpack.c.l.b16 %v849
        %v922 = vunpack.c.h.b16 %v849
        %v923 = vunpack.c.l.b16 %v850
        %v924 = vunpack.c.l.b16 %v851
        %v925 = vunpack.c.h.b16 %v851
        %v926 = vunpack.c.l.b16 %v852
        %v927 = vunpack.c.l.b16 %v853
        %v928 = vunpack.c.h.b16 %v853
        %v929 = vunpack.c.l.b16 %v854
        %v930 = vpack.c.b16 %v921, %v918
        %v931 = vpack.c.b16 %v922, %v919
        %v932 = vpack.c.b16 %v923, %v920
        %v933 = vpack.c.b16 %v927, %v924
        %v934 = vpack.c.b16 %v928, %v925
        %v935 = vpack.c.b16 %v929, %v926
        %v990 = vunpack.c.l.b16 %v855
        %v991 = vunpack.c.l.b16 %v856
        %v992 = vunpack.c.l.b16 %v857
        %v993 = vunpack.c.l.b16 %v858
        %v994 = vunpack.c.l.b16 %v859
        %v995 = vunpack.c.l.b16 %v860
        %v996 = vunpack.c.l.b16 %v861
        %v997 = vunpack.c.l.b16 %v862
        %v998 = vunpack.c.l.b16 %v863
        %v999 = vunpack.c.l.b16 %v864
        %v1000 = vunpack.c.l.b16 %v865
        %v1001 = vunpack.c.l.b16 %v866
        %v1002 = vunpack.c.l.b16 %v867
        %v1003 = vunpack.c.l.b16 %v868
        %v1004 = vunpack.c.l.b16 %v869
        %v1005 = vunpack.c.l.b16 %v870
        %v1006 = vunpack.c.l.b16 %v871
        %v1007 = vunpack.c.l.b16 %v872
        %v1008 = vunpack.c.l.b16 %v873
        %v1009 = vunpack.c.l.b16 %v874
        %v1010 = vunpack.c.l.b16 %v875
        %v1011 = vunpack.c.l.b16 %v876
        %v1012 = vunpack.c.l.b16 %v877
        %v1013 = vunpack.c.l.b16 %v878
        %v1014 = vunpack.c.l.b16 %v879
        %v1015 = vunpack.c.l.b16 %v880
        %v1016 = vunpack.c.l.b16 %v881
        %v1017 = vunpack.c.l.b16 %v882
        %v1018 = vunpack.c.l.b16 %v883
        %v1019 = vunpack.c.l.b16 %v884
        %v1020 = vunpack.c.l.b16 %v885
        %v1021 = vunpack.c.l.b16 %v886
        %v1022 = vunpack.c.l.b16 %v887
        %v1023 = vunpack.c.l.b16 %v888
        %v1024 = vunpack.c.l.b16 %v889
        %v1025 = vunpack.c.l.b16 %v890
        %v1026 = vunpack.c.l.b16 %v891
        %v1027 = vunpack.c.l.b16 %v892
        %v1028 = vunpack.c.l.b16 %v893
        %v1029 = vunpack.c.l.b16 %v894
        %v1030 = vunpack.c.l.b16 %v895
        %v1031 = vunpack.c.l.b16 %v896
        %v1032 = vunpack.c.l.b16 %v897
        %v1033 = vunpack.c.l.b16 %v898
        %v1034 = vunpack.c.l.b16 %v899
        %v1035 = vunpack.c.l.b16 %v900
        %v1036 = vunpack.c.l.b16 %v901
        %v1037 = vunpack.c.l.b16 %v902
        %v1038 = vpack.c.b16 %v991, %v990
        %v1039 = vpack.c.b16 %v993, %v992
        %v1040 = vpack.c.b16 %v995, %v994
        %v1041 = vpack.c.b16 %v997, %v996
        %v1042 = vpack.c.b16 %v999, %v998
        %v1043 = vpack.c.b16 %v1001, %v1000
        %v1044 = vpack.c.b16 %v1003, %v1002
        %v1045 = vpack.c.b16 %v1005, %v1004
        %v1046 = vpack.c.b16 %v1007, %v1006
        %v1047 = vpack.c.b16 %v1009, %v1008
        %v1048 = vpack.c.b16 %v1011, %v1010
        %v1049 = vpack.c.b16 %v1013, %v1012
        %v1050 = vpack.c.b16 %v1015, %v1014
        %v1051 = vpack.c.b16 %v1017, %v1016
        %v1052 = vpack.c.b16 %v1019, %v1018
        %v1053 = vpack.c.b16 %v1021, %v1020
        %v1054 = vpack.c.b16 %v1023, %v1022
        %v1055 = vpack.c.b16 %v1025, %v1024
        %v1056 = vpack.c.b16 %v1027, %v1026
        %v1057 = vpack.c.b16 %v1029, %v1028
        %v1058 = vpack.c.b16 %v1031, %v1030
        %v1059 = vpack.c.b16 %v1033, %v1032
        %v1060 = vpack.c.b16 %v1035, %v1034
        %v1061 = vpack.c.b16 %v1037, %v1036
        %1086 = vmatprep.subr.bf16.mxu0 0
        %1087 = vmatpush1.bf16.msra.mxu0 %v1045
        %1088 = vmatprep.subr.bf16.mxu0 0
        %1089 = vmatpush1.bf16.msra.mxu0 %v1044
        %1090 = vmatprep.subr.bf16.mxu0 0
        %1091 = vmatpush1.bf16.msra.mxu0 %v1043
        %1092 = vmatprep.subr.bf16.mxu0 0
        %1093 = vmatpush1.bf16.msra.mxu0 %v1042
        %1094 = vmatprep.subr.bf16.mxu0 0
        %1095 = vmatpush1.bf16.msra.mxu0 %v1041
        %1096 = vmatprep.subr.bf16.mxu0 0
        %1097 = vmatpush1.bf16.msra.mxu0 %v1040
        %1098 = vmatprep.subr.bf16.mxu0 0
        %1099 = vmatpush1.bf16.msra.mxu0 %v1039
        %1100 = vmatprep.subr.bf16.mxu0 0
        %1101 = vmatpush1.bf16.msra.mxu0 %v1038
        %1102 = vmatprep.subr.bf16.mxu0 0
        %1103 = vmatpush2.bf16.msra.mxu0 %v1053
        %1104 = vmatprep.subr.bf16.mxu0 0
        %1105 = vmatpush2.bf16.msra.mxu0 %v1052
        %1106 = vmatprep.subr.bf16.mxu0 0
        %1107 = vmatpush2.bf16.msra.mxu0 %v1051
        %1108 = vmatprep.subr.bf16.mxu0 0
        %1109 = vmatpush2.bf16.msra.mxu0 %v1050
        %1110 = vmatprep.subr.bf16.mxu0 0
        %1111 = vmatpush2.bf16.msra.mxu0 %v1049
        %1112 = vmatprep.subr.bf16.mxu0 0
        %1113 = vmatpush2.bf16.msra.mxu0 %v1048
        %1114 = vmatprep.subr.bf16.mxu0 0
        %1115 = vmatpush2.bf16.msra.mxu0 %v1047
        %1116 = vmatprep.subr.bf16.mxu0 0
        %1117 = vmatpush2.bf16.msra.mxu0 %v1046
        %1118 = vmatprep.mubr.bf16.mxu0 %v931
        %1119 = vmatmul.mubr.bf16.gmra.mxu0 %v930
        %v1120 = vpop.f32.mrf.mxu0
        %v1121 = vadd.f32 %v908, %v1120
        %v1122 = vpop.f32.mrf.mxu0
        %v1123 = vpop.f32.mrf.mxu0
        %v1124 = vadd.f32 %v908, %v1123
        %v1125 = vpop.f32.mrf.mxu0
        %1126 = vmatprep.mubr.bf16.mxu0 %v934
        %1127 = vmatmul.mubr.bf16.gmra.mxu0 %v933
        %v1128 = vpop.f32.mrf.mxu0
        %v1129 = vadd.f32 %v908, %v1128
        %v1130 = vpop.f32.mrf.mxu0
        %v1131 = vpop.f32.mrf.mxu0
        %v1132 = vadd.f32 %v908, %v1131
        %v1133 = vpop.f32.mrf.mxu0
        %1134 = vdwg.mxu0
        %1135 = vmatprep.subr.bf16.mxu0 0
        %1136 = vmatpush1.bf16.msra.mxu0 %v1061
        %1137 = vmatprep.subr.bf16.mxu0 0
        %1138 = vmatpush1.bf16.msra.mxu0 %v1060
        %1139 = vmatprep.subr.bf16.mxu0 0
        %1140 = vmatpush1.bf16.msra.mxu0 %v1059
        %1141 = vmatprep.subr.bf16.mxu0 0
        %1142 = vmatpush1.bf16.msra.mxu0 %v1058
        %1143 = vmatprep.subr.bf16.mxu0 0
        %1144 = vmatpush1.bf16.msra.mxu0 %v1057
        %1145 = vmatprep.subr.bf16.mxu0 0
        %1146 = vmatpush1.bf16.msra.mxu0 %v1056
        %1147 = vmatprep.subr.bf16.mxu0 0
        %1148 = vmatpush1.bf16.msra.mxu0 %v1055
        %1149 = vmatprep.subr.bf16.mxu0 0
        %1150 = vmatpush1.bf16.msra.mxu0 %v1054
        %1151 = vmatprep.subr.bf16.mxu0 0
        %1152 = vmatpush2.bf16.msra.mxu0 0
        %1153 = vmatprep.subr.bf16.mxu0 0
        %1154 = vmatpush2.bf16.msra.mxu0 0
        %1155 = vmatprep.subr.bf16.mxu0 0
        %1156 = vmatpush2.bf16.msra.mxu0 0
        %1157 = vmatprep.subr.bf16.mxu0 0
        %1158 = vmatpush2.bf16.msra.mxu0 0
        %1159 = vmatprep.subr.bf16.mxu0 0
        %1160 = vmatpush2.bf16.msra.mxu0 0
        %1161 = vmatprep.subr.bf16.mxu0 0
        %1162 = vmatpush2.bf16.msra.mxu0 0
        %1163 = vmatprep.subr.bf16.mxu0 0
        %1164 = vmatpush2.bf16.msra.mxu0 0
        %1165 = vmatprep.subr.bf16.mxu0 0
        %1166 = vmatpush2.bf16.msra.mxu0 0
        %1167 = vmatprep.mubr.bf16.mxu0 0
        %1168 = vmatmul.mubr.bf16.gmra.mxu0 %v932
        %v1169 = vpop.f32.mrf.mxu0
        %v1170 = vadd.f32 %v1121, %v1169
        %v1171 = vpop.f32.mrf.mxu0
        %v1172 = vpop.f32.mrf.mxu0
        %v1173 = vadd.f32 %v1124, %v1172
        %v1174 = vpop.f32.mrf.mxu0
        %1175 = vmatprep.mubr.bf16.mxu0 0
        %1176 = vmatmul.mubr.bf16.gmra.mxu0 %v935
        %v1177 = vpop.f32.mrf.mxu0
        %v1178 = vadd.f32 %v1129, %v1177
        %v1179 = vpop.f32.mrf.mxu0
        %v1180 = vpop.f32.mrf.mxu0
        %v1181 = vadd.f32 %v1132, %v1180
        %v1182 = vpop.f32.mrf.mxu0
        %1183 = vdwg.mxu0
        %v1184 = vld [vmem:[%s237] sm:$0xf]
        %v1185 = vld [vmem:[%s237 + $0x4] sm:$0xf]
        %v1186 = vld [vmem:[%s237 + $0x8] sm:$0xf]
        %v1187 = vld [vmem:[%s237 + $0xc] sm:$0xf]
        %v1188 = vunpack.c.l.bf16 %v1184
        %v1189 = vunpack.c.l.bf16 %v1185
        %v1190 = vunpack.c.l.bf16 %v1186
        %v1191 = vunpack.c.l.bf16 %v1187
        %v1192 = vadd.f32 %v1170, %v1188
        %v1193 = vadd.f32 %v1173, %v1189
        %v1194 = vadd.f32 %v1178, %v1190
        %v1195 = vadd.f32 %v1181, %v1191
        %v1196 = vmax.f32 %v1192, 0.0
        %v1197 = vmax.f32 %v1193, 0.0
        %v1198 = vmax.f32 %v1194, 0.0
        %v1199 = vmax.f32 %v1195, 0.0
        %1200 = vst [vmem:[%s271] sm:$0xff] %v1196
        %1201 = vst [vmem:[%s271 + $0x8] sm:$0xff] %v1197
        %1202 = vst [vmem:[%s271 + $0x10] sm:$0xff] %v1198
        %1203 = vst [vmem:[%s271 + $0x18] sm:$0xff] %v1199
        %s1204 = sand.u32 %s141, 1
        %s1205 = scalar_lea.sflag [#allocation5], %s1204
        %s1206 = sand.u32 %s141, 1
        %s1207 = smul.addr %s1206, 32
        %s1208 = scalar_lea.vmem [#allocation9], %s1207
        // Predicated region
        $region53: #{tpu_custom_call.1} parent=39 // pred_check
          %p1209 = pneg %p151
        $region54: #{tpu_custom_call.1} parent=39 // pred_check_branch
          %1211 = sbr.rel (%p1209) target = $region56
        $region55: #{tpu_custom_call.1} parent=39 // pred_region
          %s1212 = smul.u32 4, %s23
          %s1214 = ssub.s32 512, 512
          %1215 = vsyncadd %s1205, %s1214
          %s1216 = smul.addr %s1212, 128
          %s1217 = scalar_lea.hbm %s5, %s1216
          %s1218 = sshll.u32 %s1208, 4
          %s1219 = int_to_ptr.vmem [resolvable:$true] %s1218
          %1224 = dma.vmem_to_hbm [thread:$0]  %s1219, 512, %s1217, %s1205, 128, 128, 8
        $region56: #{tpu_custom_call.1} parent=39 // pred_fallthru
          _
      $region40: #{tpu_custom_call.1} parent=5 // pred_fallthru
        _
      %p1225 = scmp.le.s32.totalorder 2, %s18
      // Predicated region
      $region57: #{tpu_custom_call.1} parent=5 // pred_check
        %p1226 = pneg %p1225
      $region58: #{tpu_custom_call.1} parent=5 // pred_check_branch
        %1228 = sbr.rel (%p1226) target = $region60
      $region59: #{tpu_custom_call.1} parent=5 // pred_region
        %s1229 = ssub.s32 %s18, 2
        // Predicated region
        $region61: #{tpu_custom_call.1} parent=59 // pred_check
          %p1230 = pneg %p157
        $region62: #{tpu_custom_call.1} parent=59 // pred_check_branch
          %1232 = sbr.rel (%p1230) target = $region64
        $region63: #{tpu_custom_call.1} parent=59 // pred_region
          %s1233 = sand.u32 %s142, 1
          %s1234 = scalar_lea.sflag [#allocation5], %s1233
          %s1235 = sand.u32 %s142, 1
          %s1236 = smul.addr %s1235, 32
          %s1237 = scalar_lea.vmem [#allocation9], %s1236
          %1238 = dma.done %s1234, 512
        $region64: #{tpu_custom_call.1} parent=59 // pred_fallthru
          _
      $region60: #{tpu_custom_call.1} parent=5 // pred_fallthru
        _
    $region6: #{tpu_custom_call.1} parent=1 // loop_footer
      %s22 = sadd.s32 1, %s18
    $region7: #{tpu_custom_call.1} parent=1 // loop_footer_branch
      %17 = sbr.rel target = $region3
    $region8: #{tpu_custom_call.1} parent=1 // loop_exit
      _
    %1239 = vsyncpa [#allocation4], 1
    %s1240 = scalar_lea.sflag [#allocation4], 1
    %1241 = vsyncpa %s1240, 1
    %1242 = vsyncpa [#allocation7], 1
    %1243 = vsyncpa [#allocation5], 1
    %s1244 = scalar_lea.sflag [#allocation5], 1
    %1245 = vsyncpa %s1244, 1

</llo_original>
